<compile_context>
chip_gen: v6e
topology: v6e:2x2x1
jax: 0.10.0
libtpu: 0.0.40
codegen_flags: <defaults>
</compile_context>

<pallas_src>
import math

import jax
import jax.numpy as jnp
from jax.experimental import pallas as pl
from jax.experimental.pallas import tpu as pltpu


def _round_up(a: int, b: int) -> int:
    return (a + b - 1) // b * b


def _round_down(a: int, b: int) -> int:
    return (a // b) * b


def _inner_product_kernel(x_ref, wt_ref, o_ref):
    # x_ref:  (TILE_B, K)     raw inputs flattened over (fields, emb), K = F*E
    # wt_ref: (K, P_pad)      (w[p,f]^2 repeated E times over fields)^T, lane-dense P
    # o_ref:  (TILE_B, P_pad)
    x = x_ref[...]
    xsq = x * x                                    # VPU elementwise square
    ip = jnp.dot(                                  # canonical (M,K)@(K,N) MXU matmul
        xsq, wt_ref[...], preferred_element_type=jnp.float32
    )                                              # f32 accumulation
    o_ref[...] = ip.astype(o_ref.dtype)


def inner_product(x, weights, *, tile_b: int = 8192,
                  vmem_budget_bytes: int = 40 * 1024 * 1024,
                  out_dtype=None):
    """x: (B, n_fields, emb), weights: (output_size, n_fields) -> (B, output_size)."""
    B, F, E = x.shape
    P, F2 = weights.shape
    assert F == F2
    K = F * E
    x_item = jnp.dtype(x.dtype).itemsize
    # Output dtype follows the input (module semantics). For bf16 inputs pass
    # out_dtype=jnp.float32 if the downstream needs full-precision sums of squares.
    out_dtype = x.dtype if out_dtype is None else out_dtype
    o_item = jnp.dtype(out_dtype).itemsize

    # ---- hoisted weight prep (tiny (P, F) array; done once, outside the kernel) ----
    P_pad = _round_up(max(P, 128), 128)            # lane-dense output / MXU N axis
    w2 = weights.astype(jnp.float32) ** 2          # (P, F)
    w2 = jnp.repeat(w2, E, axis=1)                 # (P, K): column f*E + e -> w2[p, f]
    if P_pad != P:
        w2 = jnp.pad(w2, ((0, P_pad - P), (0, 0)))
    w2_t = jnp.transpose(w2).astype(x.dtype)       # (K, P_pad): MXU-canonical RHS

    # ---- batch tile sized from the complete double-buffered VMEM footprint ----
    # footprint(TILE_B) = 2*TILE_B*K*x_item  (x in-buffers)
    #                   + 2*TILE_B*P_pad*o_item  (out buffers)
    #                   + 2*K*P_pad*x_item  (resident weight block, 2 buffers)
    w_bytes = 2 * K * P_pad * x_item
    per_row = 2 * K * x_item + 2 * P_pad * o_item
    rows_budget = max(8, _round_down(max(vmem_budget_bytes - w_bytes, per_row) // per_row, 8))
    # keep >= 2 grid steps when B allows it so "parallel" feeds both v7x TensorCores
    half_b = max(8, _round_up(-(-B // 2), 8))
    TILE_B = max(8, min(tile_b, rows_budget, half_b))

    grid = (pl.cdiv(B, TILE_B),)                   # no x padding; ragged last block is fine
                                                   # (contraction is over K only)

    footprint = w_bytes + TILE_B * per_row
    vmem_limit = int(min(56 * 1024 * 1024,
                         max(32 * 1024 * 1024, footprint + 2 * 1024 * 1024)))

    cost = pl.CostEstimate(
        flops=2 * B * P_pad * K + B * K,
        transcendentals=0,
        bytes_accessed=B * K * x_item + K * P_pad * x_item + B * P_pad * o_item,
    )

    out = pl.pallas_call(
        _inner_product_kernel,
        out_shape=jax.ShapeDtypeStruct((B, P_pad), out_dtype),
        grid_spec=pltpu.PrefetchScalarGridSpec(
            num_scalar_prefetch=0,
            grid=grid,
            in_specs=[
                pl.BlockSpec((TILE_B, K), lambda i: (i, 0)),   # batch-tiled x
                pl.BlockSpec((K, P_pad), lambda i: (0, 0)),    # resident (constant) weights
            ],
            out_specs=pl.BlockSpec((TILE_B, P_pad), lambda i: (i, 0)),
        ),
        compiler_params=pltpu.CompilerParams(
            dimension_semantics=("parallel",),                 # shard batch across TCs (v7x)
            vmem_limit_bytes=vmem_limit,
        ),
        cost_estimate=cost,
    )(x.reshape(B, K), w2_t)

    # Rows already have exact extent B (no batch padding); slice columns only if padded.
    return out if P_pad == P else out[:, :P]


def xavier_uniform(key, shape, dtype=jnp.float32):
    """Xavier-uniform init matching nn.init.xavier_uniform_ for 2-D weights."""
    fan_out, fan_in = shape
    bound = math.sqrt(6.0 / (fan_in + fan_out))
    return jax.random.uniform(key, shape, dtype=dtype, minval=-bound, maxval=bound)


if __name__ == "__main__":
    # Small shapes consistent with the module: batch=2, n_fields=4, emb=16, output_size=10
    batch, n_fields, emb, output_size = 2, 4, 16, 10

    key = jax.random.PRNGKey(0)
    kx, kw = jax.random.split(key)

    x = jax.random.normal(kx, (batch, n_fields, emb), dtype=jnp.float32)
    weights = xavier_uniform(kw, (output_size, n_fields), dtype=jnp.float32)

    ip = inner_product(x, weights)
    jax.block_until_ready(ip)

    # Reference check (pure JAX, mirrors the torch.einsum chain)
    delta = jnp.einsum("rfe,pf->rpfe", x, weights)
    ref = jnp.einsum("rpfe,rpfe->rp", delta, delta)
    assert ip.shape == (batch, output_size)
    assert jnp.allclose(ip, ref, rtol=1e-5, atol=1e-5)

    print("KERNEL_OK")
</pallas_src>

<mosaic_0001>
module attributes {stable_mosaic.version = 11 : i64} {
  func.func @_inner_product_kernel(%arg0: i32, %arg1: memref<8x64xf32, #tpu.memory_space<vmem>>, %arg2: memref<64x128xf32, #tpu.memory_space<vmem>>, %arg3: memref<8x128xf32, #tpu.memory_space<vmem>>) attributes {dimension_semantics = [#tpu.dimension_semantics<parallel>], iteration_bounds = array<i64: 1>, scalar_prefetch = 0 : i64, scratch_operands = 0 : i64, tpu.core_type = #tpu.core_type<tc>, window_params = [{transform_indices = @transform_0, window_bounds = array<i64: 8, 64>}, {pipeline_mode = #tpu.pipeline_mode<synchronous>, transform_indices = @transform_1, window_bounds = array<i64: 64, 128>}, {transform_indices = @transform_2, window_bounds = array<i64: 8, 128>}]} {
    %c0 = arith.constant 0 : index
    %c0_0 = arith.constant 0 : index
    %0 = vector.load %arg1[%c0, %c0_0] : memref<8x64xf32, #tpu.memory_space<vmem>>, vector<8x64xf32>
    %1 = arith.mulf %0, %0 : vector<8x64xf32>
    %c0_1 = arith.constant 0 : index
    %c0_2 = arith.constant 0 : index
    %2 = vector.load %arg2[%c0_1, %c0_2] : memref<64x128xf32, #tpu.memory_space<vmem>>, vector<64x128xf32>
    %cst = arith.constant dense<0.000000e+00> : vector<8x128xf32>
    %3 = tpu.matmul %1, %2, %cst {dimension_numbers = #tpu.dot_dimension_numbers<[1], [0], [0], [1], [0, 0, 1, 1], [], []>} : vector<8x64xf32>, vector<64x128xf32>, vector<8x128xf32> -> vector<8x128xf32>
    %c0_3 = arith.constant 0 : index
    %c0_4 = arith.constant 0 : index
    %4 = vector.load %arg3[%c0_3, %c0_4] : memref<8x128xf32, #tpu.memory_space<vmem>>, vector<8x128xf32>
    tpu.vector_store %arg3[%c0_3, %c0_4], %3 {strides = array<i32>} : memref<8x128xf32, #tpu.memory_space<vmem>>, vector<8x128xf32>,
    return
  }
  func.func @transform_0(%arg0: i32) -> (i32, i32) {
    %c0_i32 = arith.constant 0 : i32
    %c0_i32_0 = arith.constant 0 : i32
    return %arg0, %c0_i32 : i32, i32
  }
  func.func @transform_1(%arg0: i32) -> (i32, i32) {
    %c0_i32 = arith.constant 0 : i32
    %c0_i32_0 = arith.constant 0 : i32
    %c0_i32_1 = arith.constant 0 : i32
    return %c0_i32, %c0_i32_0 : i32, i32
  }
  func.func @transform_2(%arg0: i32) -> (i32, i32) {
    %c0_i32 = arith.constant 0 : i32
    %c0_i32_0 = arith.constant 0 : i32
    return %arg0, %c0_i32 : i32, i32
  }
}

</mosaic_0001>

<llo_original>
// kernel: tpu_custom_call.1
$region0: #{tpu_custom_call.1}
  #allocation0 [shape = 'u32[]', space=smem, size = 0x4, offset = 0x4, fixed_abs, tag = 'smem constant byte address 0x4 - core index']
  #allocation1 [shape = 'u32[144,128]{1,0:T(1,128)}', space=vmem, size = 0x12000, scoped, tag = 'internal scratch']
  %s0 = inlined_call_operand.hbm [shape: f32[2,64], index: 0, kind: input, shape index: {}]
  %s1 = inlined_call_operand.hbm [shape: f32[64,128], index: 1, kind: input, shape index: {}]
  %s2 = inlined_call_operand.hbm [shape: f32[2,128], index: 2, kind: output, shape index: {}]
  %s3 = sld [smem:[#allocation0]]
  $region26: #{tpu_custom_call.1} parent=0
    _
  %s5 = ssub.s32 1, %s3
  %s6 = scalar_select 0, %s5, %s3
  $region1: #{tpu_custom_call.1} parent=0
    #allocation2 [shape = 'u8[4096]{0}', space=vmem, size = 0x1000, scoped, tag = 'input window, operand 0, single buffered']
    #allocation3 [shape = 's32[1]{0}', space=sflag, size = 0x4, scoped, tag = 'scoped memory for tpu_custom_call.1']
    #allocation4 [shape = 's32[1]{0}', space=sflag, size = 0x4, scoped, tag = 'scoped memory for tpu_custom_call.1']
    #allocation5 [shape = 'u8[32768]{0}', space=vmem, size = 0x8000, scoped, tag = 'input window, operand 1, single buffered']
    #allocation6 [shape = 's32[1]{0}', space=sflag, size = 0x4, scoped, tag = 'scoped memory for tpu_custom_call.1']
    #allocation7 [shape = 'u8[4096]{0}', space=vmem, size = 0x1000, scoped, tag = 'output window, operand 0, single buffered']
    %7 = vsyncpa [#allocation3], 0
    %8 = vsyncpa [#allocation6], 0
    %9 = vsyncpa [#allocation4], 0
    // Predicated region
    $region2: #{tpu_custom_call.1} parent=1 // pred_check
      _
    $region3: #{tpu_custom_call.1} parent=1 // pred_check_branch
      %11 = sbr.rel (0) target = $region5
    $region4: #{tpu_custom_call.1} parent=1 // pred_region
      %s13 = ssub.s32 128, 32
      %14 = vsyncadd [#allocation3], %s13
      %s15 = sshll.u32 [#allocation2], 4
      %s16 = int_to_ptr.vmem [resolvable:$true] %s15
      %21 = dma.hbm_to_vmem [thread:$0]  %s0, 32, %s16, [#allocation3], 32, 32, 2
    $region5: #{tpu_custom_call.1} parent=1 // pred_fallthru
      _
    // Predicated region
    $region6: #{tpu_custom_call.1} parent=1 // pred_check
      _
    $region7: #{tpu_custom_call.1} parent=1 // pred_check_branch
      %23 = sbr.rel (0) target = $region9
    $region8: #{tpu_custom_call.1} parent=1 // pred_region
      %s25 = ssub.s32 1024, 1024
      %26 = vsyncadd [#allocation6], %s25
      %s27 = sshll.u32 [#allocation5], 4
      %s28 = int_to_ptr.vmem [resolvable:$true] %s27
      %33 = dma.hbm_to_vmem [thread:$0]  %s1, 1024, %s28, [#allocation6], 128, 128, 8
    $region9: #{tpu_custom_call.1} parent=1 // pred_fallthru
      _
    // Predicated region
    $region10: #{tpu_custom_call.1} parent=1 // pred_check
      _
    $region11: #{tpu_custom_call.1} parent=1 // pred_check_branch
      %35 = sbr.rel (0) target = $region13
    $region12: #{tpu_custom_call.1} parent=1 // pred_region
      %36 = dma.done [#allocation3], 128
    $region13: #{tpu_custom_call.1} parent=1 // pred_fallthru
      _
    // Predicated region
    $region14: #{tpu_custom_call.1} parent=1 // pred_check
      _
    $region15: #{tpu_custom_call.1} parent=1 // pred_check_branch
      %38 = sbr.rel (0) target = $region17
    $region16: #{tpu_custom_call.1} parent=1 // pred_region
      %39 = dma.done [#allocation6], 1024
    $region17: #{tpu_custom_call.1} parent=1 // pred_fallthru
      _
    %v40 = vld [vmem:[#allocation2] sm:$0xff]
    %v41 = vmul.f32 %v40, %v40
    %v42 = vld [vmem:[#allocation5] sm:$0xff]
    %v43 = vld [vmem:[#allocation5 + $0x8] sm:$0xff]
    %v44 = vld [vmem:[#allocation5 + $0x10] sm:$0xff]
    %v45 = vld [vmem:[#allocation5 + $0x18] sm:$0xff]
    %v46 = vld [vmem:[#allocation5 + $0x20] sm:$0xff]
    %v47 = vld [vmem:[#allocation5 + $0x28] sm:$0xff]
    %v48 = vld [vmem:[#allocation5 + $0x30] sm:$0xff]
    %v49 = vld [vmem:[#allocation5 + $0x38] sm:$0xff]
    %vm50 = vcmask 523264
    %v52 = vsel %vm50, %v41, 0
    %54 = vmatprep.subr.mxu0 0.0
    %55 = vmatpush1.msra.mxu0 0.0
    %56 = vmatprep.subr.mxu0 0.0
    %57 = vmatpush1.msra.mxu0 0.0
    %58 = vmatprep.subr.mxu0 0.0
    %59 = vmatpush1.msra.mxu0 0.0
    %60 = vmatprep.subr.mxu0 0.0
    %61 = vmatpush1.msra.mxu0 0.0
    %62 = vmatprep.subr.mxu0 0.0
    %63 = vmatpush1.msra.mxu0 0.0
    %64 = vmatprep.subr.mxu0 0.0
    %65 = vmatpush1.msra.mxu0 0.0
    %66 = vmatprep.subr.mxu0 0.0
    %67 = vmatpush1.msra.mxu0 0.0
    %68 = vmatprep.subr.mxu0 0.0
    %69 = vmatpush1.msra.mxu0 0.0
    %70 = vmatprep.subr.mxu0 0.0
    %71 = vmatpush1.msra.mxu0 %v49
    %72 = vmatprep.subr.mxu0 0.0
    %73 = vmatpush1.msra.mxu0 %v48
    %74 = vmatprep.subr.mxu0 0.0
    %75 = vmatpush1.msra.mxu0 %v47
    %76 = vmatprep.subr.mxu0 0.0
    %77 = vmatpush1.msra.mxu0 %v46
    %78 = vmatprep.subr.mxu0 0.0
    %79 = vmatpush1.msra.mxu0 %v45
    %80 = vmatprep.subr.mxu0 0.0
    %81 = vmatpush1.msra.mxu0 %v44
    %82 = vmatprep.subr.mxu0 0.0
    %83 = vmatpush1.msra.mxu0 %v43
    %84 = vmatprep.subr.mxu0 0.0
    %85 = vmatpush1.msra.mxu0 %v42
    %86 = vmatprep.subr.mxu0 0.0
    %87 = vmatpush2.msra.mxu0 0.0
    %88 = vmatprep.subr.mxu0 0.0
    %89 = vmatpush2.msra.mxu0 0.0
    %90 = vmatprep.subr.mxu0 0.0
    %91 = vmatpush2.msra.mxu0 0.0
    %92 = vmatprep.subr.mxu0 0.0
    %93 = vmatpush2.msra.mxu0 0.0
    %94 = vmatprep.subr.mxu0 0.0
    %95 = vmatpush2.msra.mxu0 0.0
    %96 = vmatprep.subr.mxu0 0.0
    %97 = vmatpush2.msra.mxu0 0.0
    %98 = vmatprep.subr.mxu0 0.0
    %99 = vmatpush2.msra.mxu0 0.0
    %100 = vmatprep.subr.mxu0 0.0
    %101 = vmatpush2.msra.mxu0 0.0
    %102 = vmatprep.subr.mxu0 0.0
    %103 = vmatpush2.msra.mxu0 0.0
    %104 = vmatprep.subr.mxu0 0.0
    %105 = vmatpush2.msra.mxu0 0.0
    %106 = vmatprep.subr.mxu0 0.0
    %107 = vmatpush2.msra.mxu0 0.0
    %108 = vmatprep.subr.mxu0 0.0
    %109 = vmatpush2.msra.mxu0 0.0
    %110 = vmatprep.subr.mxu0 0.0
    %111 = vmatpush2.msra.mxu0 0.0
    %112 = vmatprep.subr.mxu0 0.0
    %113 = vmatpush2.msra.mxu0 0.0
    %114 = vmatprep.subr.mxu0 0.0
    %115 = vmatpush2.msra.mxu0 0.0
    %116 = vmatprep.subr.mxu0 0.0
    %117 = vmatpush2.msra.mxu0 0.0
    %118 = vmatprep.mubr.f32.mxu0 0.0
    %119 = vmatmul.mubr.f32.gmra.mxu0 %v52
    %v120 = vpop.f32.mrf.mxu0
    %v121 = vadd.f32 0.0, %v120
    %v122 = vpop.f32.mrf.mxu0
    %123 = vdwg.mxu0
    %124 = vst [vmem:[#allocation7] sm:$0xff] %v121
    // Predicated region
    $region18: #{tpu_custom_call.1} parent=1 // pred_check
      _
    $region19: #{tpu_custom_call.1} parent=1 // pred_check_branch
      %126 = sbr.rel (0) target = $region21
    $region20: #{tpu_custom_call.1} parent=1 // pred_region
      %s128 = ssub.s32 128, 32
      %129 = vsyncadd [#allocation4], %s128
      %s130 = sshll.u32 [#allocation7], 4
      %s131 = int_to_ptr.vmem [resolvable:$true] %s130
      %136 = dma.vmem_to_hbm [thread:$0]  %s131, 32, %s2, [#allocation4], 32, 32, 2
    $region21: #{tpu_custom_call.1} parent=1 // pred_fallthru
      _
    // Predicated region
    $region22: #{tpu_custom_call.1} parent=1 // pred_check
      _
    $region23: #{tpu_custom_call.1} parent=1 // pred_check_branch
      %138 = sbr.rel (0) target = $region25
    $region24: #{tpu_custom_call.1} parent=1 // pred_region
      %139 = dma.done [#allocation4], 128
    $region25: #{tpu_custom_call.1} parent=1 // pred_fallthru
      _
    %140 = vsyncpa [#allocation3], 1
    %141 = vsyncpa [#allocation6], 1
    %142 = vsyncpa [#allocation4], 1

</llo_original>
